<compile_context>
chip_gen: v6e
topology: v6e:2x2x1
jax: 0.10.0
libtpu: 0.0.40
codegen_flags: <defaults>
</compile_context>

<pallas_src>
import functools
import math

import jax
import jax.numpy as jnp
from jax.experimental import pallas as pl
from jax.experimental.pallas import tpu as pltpu

EPS = 1e-5  # torch.nn.LayerNorm default eps


def _round_up(x, m):
    return ((x + m - 1) // m) * m


# --------------------------------------------------------------------------
# In-kernel helpers
# --------------------------------------------------------------------------
def _erf(x):
    """Abramowitz & Stegun 7.1.26 rational approximation (|err| <= 1.5e-7).
    Built only from exp/mul/add/div/where so it lowers on every TPU
    generation and the transcendental (exp) rides the EUP slot."""
    a1, a2, a3, a4, a5 = (0.254829592, -0.284496736, 1.421413741,
                          -1.453152027, 1.061405429)
    p = 0.3275911
    sgn = jnp.where(x >= 0.0, 1.0, -1.0)
    xa = jnp.abs(x)
    t = 1.0 / (1.0 + p * xa)
    poly = ((((a5 * t + a4) * t + a3) * t + a2) * t + a1) * t
    return sgn * (1.0 - poly * jnp.exp(-xa * xa))


# --------------------------------------------------------------------------
# Kernel: rows of x -> LayerNorm (affine pre-folded) -> Linear -> GELU
# --------------------------------------------------------------------------
def trans_head_kernel(x_ref, w_ref, b_ref, o_ref, *, approx_gelu):
    """x_ref: (TB, H) row tile.  w_ref: (H, Mp) resident folded weight.
    b_ref: (1, Mp) folded bias.  o_ref: (TB, Mp) output tile."""
    x = x_ref[...].astype(jnp.float32)
    inv_h = 1.0 / x.shape[-1]

    # Two-pass (centered) LayerNorm statistics — avoids the catastrophic
    # cancellation of the E[x^2]-E[x]^2 form on real BERT activations.
    mean = jnp.sum(x, axis=-1, keepdims=True) * inv_h
    xc = x - mean
    var = jnp.sum(xc * xc, axis=-1, keepdims=True) * inv_h
    xn = xc * jax.lax.rsqrt(var + EPS)
    # gamma/beta were folded into w_ref/b_ref at prepack time.

    # TODO(synk): nn.Dropout is identity in eval mode; training-mode stochastic
    # masking (pltpu.prng_random_bits) is not implemented here.

    # Projection on the MXU (operands in the weight dtype, f32 accumulate).
    y = jnp.dot(xn.astype(w_ref.dtype), w_ref[...],
                preferred_element_type=jnp.float32)
    y = y + b_ref[...]

    if approx_gelu:
        # tanh GELU: transcendental on the EUP, far fewer VALU ops (bf16 path).
        g = jax.nn.gelu(y, approximate=True)
    else:
        # Exact (erf) GELU — matches torch.nn.GELU() default to ~1.5e-7.
        g = 0.5 * y * (1.0 + _erf(y * (1.0 / math.sqrt(2.0))))
    o_ref[...] = g.astype(o_ref.dtype)


# --------------------------------------------------------------------------
# Parameter handling
# --------------------------------------------------------------------------
def init_torch_params(key, hidden_size, middle_hidden_size):
    """Parameters in PyTorch layout: LayerNorm(H) + Linear(H, M).
    (Non-trivial gamma/beta so the prepack folding is actually exercised.)"""
    k_w, k_b, k_g, k_be = jax.random.split(key, 4)
    bound = 1.0 / math.sqrt(hidden_size)
    return {
        "ln_gamma": 1.0 + 0.1 * jax.random.normal(k_g, (hidden_size,), jnp.float32),
        "ln_beta": 0.05 * jax.random.normal(k_be, (hidden_size,), jnp.float32),
        # nn.Linear(H, M): weight (M, H), bias (M,)
        "proj_w": 0.02 * jax.random.normal(
            k_w, (middle_hidden_size, hidden_size), jnp.float32),
        "proj_b": jax.random.uniform(
            k_b, (middle_hidden_size,), jnp.float32, -bound, bound),
    }


def prepack_params(torch_params, param_dtype=jnp.float32):
    """One-time prepack: transpose to (H, M), fold LayerNorm affine into the
    projection, pad M to a lane-dense multiple of 128 only when needed, then
    optionally cast the big weight to bf16 (bias stays f32)."""
    gamma = torch_params["ln_gamma"].astype(jnp.float32)
    beta = torch_params["ln_beta"].astype(jnp.float32)
    w_mh = torch_params["proj_w"].astype(jnp.float32)      # (M, H)
    b = torch_params["proj_b"].astype(jnp.float32)         # (M,)
    M, H = w_mh.shape

    w_hm = w_mh.T                                          # (H, M)
    # (xn*gamma + beta) @ W + b  ==  xn @ (gamma[:,None]*W)  +  (beta @ W + b)
    b_fold = beta @ w_hm + b
    w_fold = gamma[:, None] * w_hm

    # Pad the output dim only when it is >=128 and not lane-aligned; a block
    # whose last dim equals the full array dim is legal, so small M stays
    # unpadded and the wrapper never has to slice the result.
    Mp = M if (M % 128 == 0 or M < 128) else _round_up(M, 128)
    if Mp != M:
        w_fold = jnp.pad(w_fold, ((0, 0), (0, Mp - M)))
        b_fold = jnp.pad(b_fold, (0, Mp - M))
    return {
        "w": w_fold.astype(param_dtype),                   # (H, Mp)
        "b": b_fold.reshape(1, Mp).astype(jnp.float32),    # (1, Mp)
        "out_features": int(M),
    }


def _vmem_capacity_bytes():
    try:
        return int(pltpu.get_tpu_info().vmem_capacity_bytes)
    except Exception:
        return 64 << 20  # conservative (v7x per-TC)


def _pick_row_tile(N, H, Mp, w_bytes, x_itemsize, o_itemsize, budget):
    """Row tile: MXU-friendly multiple of 128 that fits the generation-aware
    VMEM budget, prefers dividing the row count (no padding) and keeps the
    grid at >= 2 steps so v7x's two TensorCores both get work."""
    if N <= 128:
        return N            # single tile; block dim == full dim is always legal
    n8 = _round_up(N, 8)

    def fits(tb):
        # Pallas double-buffers even constant-index blocks -> count weight 2x.
        return (2 * w_bytes + 2 * tb * (H * x_itemsize + Mp * o_itemsize)
                + 2 * Mp * 4 + (1 << 20)) <= budget

    cap = max(128, (n8 // 2) // 128 * 128)   # keep >= 2 grid steps when possible
    tiles = [t for t in (1024, 768, 512, 384, 256, 128) if t <= cap and fits(t)]
    if not tiles:
        return 128
    for tb in tiles:                          # largest tile that avoids padding
        if n8 % tb == 0:
            return tb
    return tiles[0]


# --------------------------------------------------------------------------
# Wrapper
# --------------------------------------------------------------------------
def trans_head_rows(x2d, packed, *, out_dtype=None, approx_gelu=False):
    """x2d: (N, H) rows -> (N, M) rows through LayerNorm->Linear->GELU."""
    N, H = x2d.shape
    w = packed["w"]
    b = packed["b"]
    Mp = w.shape[1]
    M = packed["out_features"]
    if out_dtype is None:
        out_dtype = x2d.dtype                 # bf16 in -> bf16 out (half the I/O)
    o_itemsize = jnp.dtype(out_dtype).itemsize
    w_bytes = w.size * w.dtype.itemsize

    capacity = _vmem_capacity_bytes()
    budget = int(capacity * 0.75)             # ~96 MiB on v5e/v6e, ~48 MiB on v7x
    TB = _pick_row_tile(N, H, Mp, w_bytes, x2d.dtype.itemsize, o_itemsize, budget)
    Np = _round_up(N, TB)
    if Np != N:
        x2d = jnp.pad(x2d, ((0, Np - N), (0, 0)))
    grid = (Np // TB,)

    need = (2 * w_bytes
            + 2 * TB * (H * x2d.dtype.itemsize + Mp * o_itemsize)
            + 2 * Mp * 4)
    vmem_limit = int(min(int(capacity * 0.9), max(32 << 20, need + (8 << 20))))

    cost = pl.CostEstimate(
        flops=2 * Np * H * Mp + 6 * Np * H,
        transcendentals=Np * Mp,
        bytes_accessed=(Np * H * x2d.dtype.itemsize
                        + Np * Mp * o_itemsize + w_bytes + Mp * 4),
    )

    out = pl.pallas_call(
        functools.partial(trans_head_kernel, approx_gelu=approx_gelu),
        out_shape=jax.ShapeDtypeStruct((Np, Mp), out_dtype),
        grid_spec=pltpu.PrefetchScalarGridSpec(
            num_scalar_prefetch=0,
            grid=grid,
            in_specs=[
                pl.BlockSpec((TB, H), lambda i: (i, 0)),   # row tiles stream
                pl.BlockSpec((H, Mp), lambda i: (0, 0)),   # folded weight resident
                pl.BlockSpec((1, Mp), lambda i: (0, 0)),   # folded bias resident
            ],
            out_specs=pl.BlockSpec((TB, Mp), lambda i: (i, 0)),
        ),
        compiler_params=pltpu.CompilerParams(
            dimension_semantics=("parallel",),
            vmem_limit_bytes=vmem_limit),
        cost_estimate=cost,
    )(x2d, w, b)

    if Np != N or Mp != M:
        # TODO(synk): a downstream consumer could take the padded slab instead
        # of paying this extra HBM pass; not hit at lane-aligned / small shapes.
        out = out[:N, :M]
    return out


def text_model_forward(hidden_state, pooler_out, packed, *, approx_gelu=False):
    """Equivalent of TextModel.forward AFTER the BERT backbone:
    returns (trans(last_hidden_state), trans(pooler_output)).
    The big slab and the tiny pooler rows are separate calls so the dominant
    activation stream is never concatenated/copied in HBM."""
    # TODO(synk): the pretrained BERT encoder itself is not translated; its
    # outputs (last_hidden_state, pooler_output) are taken as inputs here.
    B, S, H = hidden_state.shape
    seq = trans_head_rows(hidden_state.reshape(B * S, H), packed,
                          approx_gelu=approx_gelu)
    pool = trans_head_rows(pooler_out, packed, approx_gelu=approx_gelu)
    return seq.reshape(B, S, -1), pool


# --------------------------------------------------------------------------
# Pure-JAX reference (PyTorch semantics, eval mode)
# --------------------------------------------------------------------------
def reference_trans(x, tp):
    mean = x.mean(-1, keepdims=True)
    var = ((x - mean) ** 2).mean(-1, keepdims=True)
    xn = (x - mean) / jnp.sqrt(var + EPS) * tp["ln_gamma"] + tp["ln_beta"]
    y = xn @ tp["proj_w"].T + tp["proj_b"]
    return 0.5 * y * (1.0 + jax.lax.erf(y / jnp.sqrt(2.0)))


# --------------------------------------------------------------------------
if __name__ == "__main__":
    B, S, H, M = 2, 8, 32, 64  # batch, seq, bert hidden, middle_hidden_size
    key = jax.random.PRNGKey(0)
    k_h, k_p, k_w = jax.random.split(key, 3)

    hidden_state = jax.random.normal(k_h, (B, S, H), jnp.float32)
    pooler_out = jax.random.normal(k_p, (B, H), jnp.float32)
    torch_params = init_torch_params(k_w, H, M)

    ref_seq = reference_trans(hidden_state, torch_params)
    ref_pool = reference_trans(pooler_out, torch_params)

    # f32 path — exact-erf GELU (tolerance covers MXU pass behaviour for f32
    # operands plus the 1.5e-7 erf approximation).
    packed_f32 = prepack_params(torch_params, param_dtype=jnp.float32)
    seq_o, pool_o = text_model_forward(hidden_state, pooler_out, packed_f32)
    seq_o = jax.block_until_ready(seq_o)
    pool_o = jax.block_until_ready(pool_o)

    assert seq_o.shape == (B, S, M) and pool_o.shape == (B, M)
    assert jnp.allclose(seq_o, ref_seq, atol=2e-3, rtol=2e-3), \
        f"seq max abs err {jnp.abs(seq_o - ref_seq).max()}"
    assert jnp.allclose(pool_o, ref_pool, atol=2e-3, rtol=2e-3), \
        f"pool max abs err {jnp.abs(pool_o - ref_pool).max()}"

    # Production fast path: bf16 weights AND bf16 activations/outputs (half the
    # HBM stream on a memory-bound kernel), tanh GELU on the EUP — loose
    # tolerance. (f32-weight matmul should not be used on v6e/v7x in prod.)
    packed_bf16 = prepack_params(torch_params, param_dtype=jnp.bfloat16)
    seq_b, pool_b = text_model_forward(hidden_state.astype(jnp.bfloat16),
                                       pooler_out.astype(jnp.bfloat16),
                                       packed_bf16, approx_gelu=True)
    seq_b = jax.block_until_ready(seq_b)
    pool_b = jax.block_until_ready(pool_b)
    assert seq_b.dtype == jnp.bfloat16 and pool_b.dtype == jnp.bfloat16
    assert jnp.allclose(seq_b.astype(jnp.float32), ref_seq, atol=1e-1, rtol=1e-1)
    assert jnp.allclose(pool_b.astype(jnp.float32), ref_pool, atol=1e-1, rtol=1e-1)

    print("KERNEL_OK")
</pallas_src>

<mosaic_0001>
module attributes {stable_mosaic.version = 11 : i64} {
  func.func @trans_head_kernel(%arg0: i32, %arg1: memref<16x32xf32, #tpu.memory_space<vmem>>, %arg2: memref<32x64xf32, #tpu.memory_space<vmem>>, %arg3: memref<1x64xf32, #tpu.memory_space<vmem>>, %arg4: memref<16x64xf32, #tpu.memory_space<vmem>>) attributes {dimension_semantics = [#tpu.dimension_semantics<parallel>], iteration_bounds = array<i64: 1>, scalar_prefetch = 0 : i64, scratch_operands = 0 : i64, tpu.core_type = #tpu.core_type<tc>, window_params = [{transform_indices = @transform_0, window_bounds = array<i64: 16, 32>}, {pipeline_mode = #tpu.pipeline_mode<synchronous>, transform_indices = @transform_1, window_bounds = array<i64: 32, 64>}, {pipeline_mode = #tpu.pipeline_mode<synchronous>, transform_indices = @transform_2, window_bounds = array<i64: 1, 64>}, {transform_indices = @transform_3, window_bounds = array<i64: 16, 64>}]} {
    %c0 = arith.constant 0 : index
    %c0_0 = arith.constant 0 : index
    %0 = vector.load %arg1[%c0, %c0_0] : memref<16x32xf32, #tpu.memory_space<vmem>>, vector<16x32xf32>
    %cst = arith.constant dense<0.000000e+00> : vector<16xf32>
    %1 = vector.multi_reduction <add>, %0, %cst [1] : vector<16x32xf32> to vector<16xf32>
    %2 = vector.shape_cast %1 : vector<16xf32> to vector<16x1xf32>
    %cst_1 = arith.constant 3.125000e-02 : f32
    %3 = vector.broadcast %cst_1 : f32 to vector<16x1xf32>
    %4 = arith.mulf %2, %3 : vector<16x1xf32>
    %5 = vector.broadcast %4 : vector<16x1xf32> to vector<16x32xf32>
    %6 = arith.subf %0, %5 : vector<16x32xf32>
    %7 = arith.mulf %6, %6 : vector<16x32xf32>
    %cst_2 = arith.constant dense<0.000000e+00> : vector<16xf32>
    %8 = vector.multi_reduction <add>, %7, %cst_2 [1] : vector<16x32xf32> to vector<16xf32>
    %9 = vector.shape_cast %8 : vector<16xf32> to vector<16x1xf32>
    %cst_3 = arith.constant 3.125000e-02 : f32
    %10 = vector.broadcast %cst_3 : f32 to vector<16x1xf32>
    %11 = arith.mulf %9, %10 : vector<16x1xf32>
    %cst_4 = arith.constant 9.99999974E-6 : f32
    %12 = vector.broadcast %cst_4 : f32 to vector<16x1xf32>
    %13 = arith.addf %11, %12 : vector<16x1xf32>
    %14 = math.rsqrt %13 : vector<16x1xf32>
    %15 = vector.broadcast %14 : vector<16x1xf32> to vector<16x32xf32>
    %16 = arith.mulf %6, %15 : vector<16x32xf32>
    %c0_5 = arith.constant 0 : index
    %c0_6 = arith.constant 0 : index
    %17 = vector.load %arg2[%c0_5, %c0_6] : memref<32x64xf32, #tpu.memory_space<vmem>>, vector<32x64xf32>
    %cst_7 = arith.constant dense<0.000000e+00> : vector<16x64xf32>
    %18 = tpu.matmul %16, %17, %cst_7 {dimension_numbers = #tpu.dot_dimension_numbers<[1], [0], [0], [1], [0, 0, 1, 1], [], []>} : vector<16x32xf32>, vector<32x64xf32>, vector<16x64xf32> -> vector<16x64xf32>
    %c0_8 = arith.constant 0 : index
    %c0_9 = arith.constant 0 : index
    %19 = vector.load %arg3[%c0_8, %c0_9] : memref<1x64xf32, #tpu.memory_space<vmem>>, vector<1x64xf32>
    %20 = vector.broadcast %19 : vector<1x64xf32> to vector<16x64xf32>
    %21 = arith.addf %18, %20 : vector<16x64xf32>
    %cst_10 = arith.constant 5.000000e-01 : f32
    %22 = vector.broadcast %cst_10 : f32 to vector<16x64xf32>
    %23 = arith.mulf %22, %21 : vector<16x64xf32>
    %cst_11 = arith.constant 0.707106769 : f32
    %24 = vector.broadcast %cst_11 : f32 to vector<16x64xf32>
    %25 = arith.mulf %21, %24 : vector<16x64xf32>
    %cst_12 = arith.constant 0.000000e+00 : f32
    %26 = vector.broadcast %cst_12 : f32 to vector<16x64xf32>
    %27 = arith.cmpf oge, %25, %26 : vector<16x64xf32>
    %cst_13 = arith.constant 1.000000e+00 : f32
    %cst_14 = arith.constant -1.000000e+00 : f32
    %28 = vector.broadcast %cst_13 : f32 to vector<16x64xf32>
    %29 = vector.broadcast %cst_14 : f32 to vector<16x64xf32>
    %30 = arith.select %27, %28, %29 : vector<16x64xi1>, vector<16x64xf32>
    %31 = math.absf %25 : vector<16x64xf32>
    %cst_15 = arith.constant 0.327591091 : f32
    %32 = vector.broadcast %cst_15 : f32 to vector<16x64xf32>
    %33 = arith.mulf %32, %31 : vector<16x64xf32>
    %cst_16 = arith.constant 1.000000e+00 : f32
    %34 = vector.broadcast %cst_16 : f32 to vector<16x64xf32>
    %35 = arith.addf %34, %33 : vector<16x64xf32>
    %cst_17 = arith.constant 1.000000e+00 : f32
    %36 = vector.broadcast %cst_17 : f32 to vector<16x64xf32>
    %37 = arith.divf %36, %35 : vector<16x64xf32>
    %cst_18 = arith.constant 1.06140542 : f32
    %38 = vector.broadcast %cst_18 : f32 to vector<16x64xf32>
    %39 = arith.mulf %38, %37 : vector<16x64xf32>
    %cst_19 = arith.constant -1.45315206 : f32
    %40 = vector.broadcast %cst_19 : f32 to vector<16x64xf32>
    %41 = arith.addf %39, %40 : vector<16x64xf32>
    %42 = arith.mulf %41, %37 : vector<16x64xf32>
    %cst_20 = arith.constant 1.42141378 : f32
    %43 = vector.broadcast %cst_20 : f32 to vector<16x64xf32>
    %44 = arith.addf %42, %43 : vector<16x64xf32>
    %45 = arith.mulf %44, %37 : vector<16x64xf32>
    %cst_21 = arith.constant -0.284496725 : f32
    %46 = vector.broadcast %cst_21 : f32 to vector<16x64xf32>
    %47 = arith.addf %45, %46 : vector<16x64xf32>
    %48 = arith.mulf %47, %37 : vector<16x64xf32>
    %cst_22 = arith.constant 0.254829586 : f32
    %49 = vector.broadcast %cst_22 : f32 to vector<16x64xf32>
    %50 = arith.addf %48, %49 : vector<16x64xf32>
    %51 = arith.mulf %50, %37 : vector<16x64xf32>
    %cst_23 = arith.constant 0.000000e+00 : f32
    %52 = vector.broadcast %cst_23 : f32 to vector<16x64xf32>
    %53 = arith.subf %52, %31 : vector<16x64xf32>
    %54 = arith.mulf %53, %31 : vector<16x64xf32>
    %55 = math.exp %54 : vector<16x64xf32>
    %56 = arith.mulf %51, %55 : vector<16x64xf32>
    %cst_24 = arith.constant 1.000000e+00 : f32
    %57 = vector.broadcast %cst_24 : f32 to vector<16x64xf32>
    %58 = arith.subf %57, %56 : vector<16x64xf32>
    %59 = arith.mulf %30, %58 : vector<16x64xf32>
    %cst_25 = arith.constant 1.000000e+00 : f32
    %60 = vector.broadcast %cst_25 : f32 to vector<16x64xf32>
    %61 = arith.addf %60, %59 : vector<16x64xf32>
    %62 = arith.mulf %23, %61 : vector<16x64xf32>
    %c0_26 = arith.constant 0 : index
    %c0_27 = arith.constant 0 : index
    %63 = vector.load %arg4[%c0_26, %c0_27] : memref<16x64xf32, #tpu.memory_space<vmem>>, vector<16x64xf32>
    tpu.vector_store %arg4[%c0_26, %c0_27], %62 {strides = array<i32>} : memref<16x64xf32, #tpu.memory_space<vmem>>, vector<16x64xf32>,
    return
  }
  func.func @transform_0(%arg0: i32) -> (i32, i32) {
    %c0_i32 = arith.constant 0 : i32
    %c0_i32_0 = arith.constant 0 : i32
    return %arg0, %c0_i32 : i32, i32
  }
  func.func @transform_1(%arg0: i32) -> (i32, i32) {
    %c0_i32 = arith.constant 0 : i32
    %c0_i32_0 = arith.constant 0 : i32
    %c0_i32_1 = arith.constant 0 : i32
    return %c0_i32, %c0_i32_0 : i32, i32
  }
  func.func @transform_2(%arg0: i32) -> (i32, i32) {
    %c0_i32 = arith.constant 0 : i32
    %c0_i32_0 = arith.constant 0 : i32
    %c0_i32_1 = arith.constant 0 : i32
    return %c0_i32, %c0_i32_0 : i32, i32
  }
  func.func @transform_3(%arg0: i32) -> (i32, i32) {
    %c0_i32 = arith.constant 0 : i32
    %c0_i32_0 = arith.constant 0 : i32
    return %arg0, %c0_i32 : i32, i32
  }
}

</mosaic_0001>

<llo_original>
// kernel: tpu_custom_call.1
$region0: #{tpu_custom_call.1}
  #allocation0 [shape = 'u32[]', space=smem, size = 0x4, offset = 0x4, fixed_abs, tag = 'smem constant byte address 0x4 - core index']
  #allocation1 [shape = 'u32[144,128]{1,0:T(1,128)}', space=vmem, size = 0x12000, scoped, tag = 'internal scratch']
  %s0 = inlined_call_operand.hbm [shape: f32[16,32], index: 0, kind: input, shape index: {}]
  %s1 = inlined_call_operand.hbm [shape: f32[32,64], index: 1, kind: input, shape index: {}]
  %s2 = inlined_call_operand.vmem [shape: f32[1,64], index: 2, kind: input, shape index: {}]
  %s3 = inlined_call_operand.hbm [shape: f32[16,64], index: 3, kind: output, shape index: {}]
  %s4 = sld [smem:[#allocation0]]
  $region30: #{tpu_custom_call.1} parent=0
    _
  %s6 = ssub.s32 1, %s4
  %s7 = scalar_select 0, %s6, %s4
  $region1: #{tpu_custom_call.1} parent=0
    #allocation2 [shape = 'u8[8192]{0}', space=vmem, size = 0x2000, scoped, tag = 'input window, operand 0, single buffered']
    #allocation3 [shape = 's32[1]{0}', space=sflag, size = 0x4, scoped, tag = 'scoped memory for tpu_custom_call.1']
    #allocation4 [shape = 's32[1]{0}', space=sflag, size = 0x4, scoped, tag = 'scoped memory for tpu_custom_call.1']
    #allocation5 [shape = 'u8[16384]{0}', space=vmem, size = 0x4000, scoped, tag = 'input window, operand 1, single buffered']
    #allocation6 [shape = 's32[1]{0}', space=sflag, size = 0x4, scoped, tag = 'scoped memory for tpu_custom_call.1']
    #allocation7 [shape = 'u8[8192]{0}', space=vmem, size = 0x2000, scoped, tag = 'output window, operand 0, single buffered']
    %8 = vsyncpa [#allocation3], 0
    %9 = vsyncpa [#allocation6], 0
    %10 = vsyncpa [#allocation4], 0
    // Predicated region
    $region2: #{tpu_custom_call.1} parent=1 // pred_check
      _
    $region3: #{tpu_custom_call.1} parent=1 // pred_check_branch
      %12 = sbr.rel (0) target = $region5
    $region4: #{tpu_custom_call.1} parent=1 // pred_region
      %s14 = ssub.s32 256, 256
      %15 = vsyncadd [#allocation3], %s14
      %s16 = sshll.u32 [#allocation2], 4
      %s17 = int_to_ptr.vmem [resolvable:$true] %s16
      %22 = dma.hbm_to_vmem [thread:$0]  %s0, 256, %s17, [#allocation3], 128, 128, 8
    $region5: #{tpu_custom_call.1} parent=1 // pred_fallthru
      _
    // Predicated region
    $region6: #{tpu_custom_call.1} parent=1 // pred_check
      _
    $region7: #{tpu_custom_call.1} parent=1 // pred_check_branch
      %24 = sbr.rel (0) target = $region9
    $region8: #{tpu_custom_call.1} parent=1 // pred_region
      %s26 = ssub.s32 512, 512
      %27 = vsyncadd [#allocation6], %s26
      %s28 = sshll.u32 [#allocation5], 4
      %s29 = int_to_ptr.vmem [resolvable:$true] %s28
      %34 = dma.hbm_to_vmem [thread:$0]  %s1, 512, %s29, [#allocation6], 128, 128, 8
    $region9: #{tpu_custom_call.1} parent=1 // pred_fallthru
      _
    // Predicated region
    $region10: #{tpu_custom_call.1} parent=1 // pred_check
      _
    $region11: #{tpu_custom_call.1} parent=1 // pred_check_branch
      %36 = sbr.rel (0) target = $region13
    $region12: #{tpu_custom_call.1} parent=1 // pred_region
      _
    $region13: #{tpu_custom_call.1} parent=1 // pred_fallthru
      _
    // Predicated region
    $region14: #{tpu_custom_call.1} parent=1 // pred_check
      _
    $region15: #{tpu_custom_call.1} parent=1 // pred_check_branch
      %38 = sbr.rel (0) target = $region17
    $region16: #{tpu_custom_call.1} parent=1 // pred_region
      %39 = dma.done [#allocation3], 256
    $region17: #{tpu_custom_call.1} parent=1 // pred_fallthru
      _
    // Predicated region
    $region18: #{tpu_custom_call.1} parent=1 // pred_check
      _
    $region19: #{tpu_custom_call.1} parent=1 // pred_check_branch
      %41 = sbr.rel (0) target = $region21
    $region20: #{tpu_custom_call.1} parent=1 // pred_region
      %42 = dma.done [#allocation6], 512
    $region21: #{tpu_custom_call.1} parent=1 // pred_fallthru
      _
    %v43 = vld [vmem:[#allocation2] sm:$0xff]
    %v44 = vld [vmem:[#allocation2 + $0x8] sm:$0xff]
    %vm45 = vcmask 261120
    %v46 = vsel %vm45, %v43, 0.0
    %47 = vadd.xlane.f32.xlu0 %v46
    %v48 = vpop.xlane.xlu0 %47
    %v49 = vsel %vm45, %v44, 0.0
    %50 = vadd.xlane.f32.xlu0 %v49
    %v51 = vpop.xlane.xlu0 %50
    %v52 = vmul.f32 %v48, 0.03125
    %v53 = vmul.f32 %v51, 0.03125
    %v54 = vsub.f32 %v43, %v52
    %v55 = vsub.f32 %v44, %v53
    %v56 = vmul.f32 %v54, %v54
    %v57 = vmul.f32 %v55, %v55
    %v58 = vsel %vm45, %v56, 0.0
    %59 = vadd.xlane.f32.xlu0 %v58
    %v60 = vpop.xlane.xlu0 %59
    %v61 = vsel %vm45, %v57, 0.0
    %62 = vadd.xlane.f32.xlu0 %v61
    %v63 = vpop.xlane.xlu0 %62
    %v64 = vmul.f32 %v60, 0.03125
    %v65 = vmul.f32 %v63, 0.03125
    %v66 = vadd.f32 %v64, 1e-05
    %v67 = vadd.f32 %v65, 1e-05
    %v68 = vrsqrt.pop %v66
    %v69 = vrsqrt.pop %v67
    %v70 = vmul.f32 %v54, %v68
    %v71 = vmul.f32 %v55, %v69
    %v72 = vld [vmem:[#allocation5] sm:$0xff]
    %v73 = vld [vmem:[#allocation5 + $0x8] sm:$0xff]
    %v74 = vld [vmem:[#allocation5 + $0x10] sm:$0xff]
    %v75 = vld [vmem:[#allocation5 + $0x18] sm:$0xff]
    %v76 = vld [vmem:[%s2] sm:$0x1]
    %v78 = vlaneseq
    %v79 = vshrl.u32 %v78, 7
    %v80 = vsub.s32 0, %v79
    %v81 = vrot.slane %v76, %v80
    %v84 = vsel %vm45, %v70, 0
    %v87 = vsel %vm45, %v71, 0
    %89 = vmatprep.subr.mxu0 0.0
    %90 = vmatpush1.msra.mxu0 0.0
    %91 = vmatprep.subr.mxu0 0.0
    %92 = vmatpush1.msra.mxu0 0.0
    %93 = vmatprep.subr.mxu0 0.0
    %94 = vmatpush1.msra.mxu0 0.0
    %95 = vmatprep.subr.mxu0 0.0
    %96 = vmatpush1.msra.mxu0 0.0
    %97 = vmatprep.subr.mxu0 0.0
    %98 = vmatpush1.msra.mxu0 0.0
    %99 = vmatprep.subr.mxu0 0.0
    %100 = vmatpush1.msra.mxu0 0.0
    %101 = vmatprep.subr.mxu0 0.0
    %102 = vmatpush1.msra.mxu0 0.0
    %103 = vmatprep.subr.mxu0 0.0
    %104 = vmatpush1.msra.mxu0 0.0
    %105 = vmatprep.subr.mxu0 0.0
    %106 = vmatpush1.msra.mxu0 0.0
    %107 = vmatprep.subr.mxu0 0.0
    %108 = vmatpush1.msra.mxu0 0.0
    %109 = vmatprep.subr.mxu0 0.0
    %110 = vmatpush1.msra.mxu0 0.0
    %111 = vmatprep.subr.mxu0 0.0
    %112 = vmatpush1.msra.mxu0 0.0
    %113 = vmatprep.subr.mxu0 0.0
    %114 = vmatpush1.msra.mxu0 %v75
    %115 = vmatprep.subr.mxu0 0.0
    %116 = vmatpush1.msra.mxu0 %v74
    %117 = vmatprep.subr.mxu0 0.0
    %118 = vmatpush1.msra.mxu0 %v73
    %119 = vmatprep.subr.mxu0 0.0
    %120 = vmatpush1.msra.mxu0 %v72
    %121 = vmatprep.subr.mxu0 0.0
    %122 = vmatpush2.msra.mxu0 0.0
    %123 = vmatprep.subr.mxu0 0.0
    %124 = vmatpush2.msra.mxu0 0.0
    %125 = vmatprep.subr.mxu0 0.0
    %126 = vmatpush2.msra.mxu0 0.0
    %127 = vmatprep.subr.mxu0 0.0
    %128 = vmatpush2.msra.mxu0 0.0
    %129 = vmatprep.subr.mxu0 0.0
    %130 = vmatpush2.msra.mxu0 0.0
    %131 = vmatprep.subr.mxu0 0.0
    %132 = vmatpush2.msra.mxu0 0.0
    %133 = vmatprep.subr.mxu0 0.0
    %134 = vmatpush2.msra.mxu0 0.0
    %135 = vmatprep.subr.mxu0 0.0
    %136 = vmatpush2.msra.mxu0 0.0
    %137 = vmatprep.subr.mxu0 0.0
    %138 = vmatpush2.msra.mxu0 0.0
    %139 = vmatprep.subr.mxu0 0.0
    %140 = vmatpush2.msra.mxu0 0.0
    %141 = vmatprep.subr.mxu0 0.0
    %142 = vmatpush2.msra.mxu0 0.0
    %143 = vmatprep.subr.mxu0 0.0
    %144 = vmatpush2.msra.mxu0 0.0
    %145 = vmatprep.subr.mxu0 0.0
    %146 = vmatpush2.msra.mxu0 0.0
    %147 = vmatprep.subr.mxu0 0.0
    %148 = vmatpush2.msra.mxu0 0.0
    %149 = vmatprep.subr.mxu0 0.0
    %150 = vmatpush2.msra.mxu0 0.0
    %151 = vmatprep.subr.mxu0 0.0
    %152 = vmatpush2.msra.mxu0 0.0
    %153 = vmatprep.mubr.f32.mxu0 0.0
    %154 = vmatmul.mubr.f32.gmra.mxu0 %v84
    %v155 = vpop.f32.mrf.mxu0
    %v156 = vadd.f32 %v81, %v155
    %v157 = vpop.f32.mrf.mxu0
    %158 = vmatprep.mubr.f32.mxu0 0.0
    %159 = vmatmul.mubr.f32.gmra.mxu0 %v87
    %v160 = vpop.f32.mrf.mxu0
    %v161 = vadd.f32 %v81, %v160
    %v162 = vpop.f32.mrf.mxu0
    %163 = vdwg.mxu0
    %v164 = vmul.f32 %v156, 0.5
    %v165 = vmul.f32 %v161, 0.5
    %v166 = vmul.f32 %v156, 0.70710677
    %v167 = vmul.f32 %v161, 0.70710677
    %vm168 = vcmp.ge.f32.partialorder %v166, 0.0
    %vm169 = vcmp.ge.f32.partialorder %v167, 0.0
    %v170 = vsel %vm168, 1.0, -1.0
    %v171 = vsel %vm169, 1.0, -1.0
    %v172 = vand.u32 2147483647, %v166
    %v173 = vand.u32 2147483647, %v167
    %v174 = vmul.f32 %v172, 0.3275911
    %v175 = vmul.f32 %v173, 0.3275911
    %v176 = vadd.f32 %v174, 1.0
    %v177 = vadd.f32 %v175, 1.0
    %v178 = vrcp.pop %v176
    %v179 = vmul.f32 1.0, %v178
    %v180 = vrcp.pop %v177
    %v181 = vmul.f32 1.0, %v180
    %v182 = vmul.f32 %v179, 1.0614054
    %v183 = vmul.f32 %v181, 1.0614054
    %v184 = vadd.f32 %v182, -1.4531521
    %v185 = vadd.f32 %v183, -1.4531521
    %v186 = vmul.f32 %v184, %v179
    %v187 = vmul.f32 %v185, %v181
    %v188 = vadd.f32 %v186, 1.4214138
    %v189 = vadd.f32 %v187, 1.4214138
    %v190 = vmul.f32 %v188, %v179
    %v191 = vmul.f32 %v189, %v181
    %v192 = vadd.f32 %v190, -0.28449672
    %v193 = vadd.f32 %v191, -0.28449672
    %v194 = vmul.f32 %v192, %v179
    %v195 = vmul.f32 %v193, %v181
    %v196 = vadd.f32 %v194, 0.2548296
    %v197 = vadd.f32 %v195, 0.2548296
    %v198 = vmul.f32 %v196, %v179
    %v199 = vmul.f32 %v197, %v181
    %v200 = vsub.f32 0.0, %v172
    %v201 = vsub.f32 0.0, %v173
    %v202 = vmul.f32 %v200, %v172
    %v203 = vmul.f32 %v201, %v173
    %v204 = vmul.f32 %v202, 1.442695
    %v205 = vpow.pop %v204
    %v206 = vmul.f32 %v203, 1.442695
    %v207 = vpow.pop %v206
    %v208 = vmul.f32 %v198, %v205
    %v209 = vmul.f32 %v199, %v207
    %v210 = vsub.f32 1.0, %v208
    %v211 = vsub.f32 1.0, %v209
    %v212 = vmul.f32 %v170, %v210
    %v213 = vmul.f32 %v171, %v211
    %v214 = vadd.f32 %v212, 1.0
    %v215 = vadd.f32 %v213, 1.0
    %v216 = vmul.f32 %v164, %v214
    %v217 = vmul.f32 %v165, %v215
    %vm218 = vcmask 523264
    %219 = vst.msk [vmem:[#allocation7] sm:$0xff] %vm218, %v216
    %220 = vst.msk [vmem:[#allocation7 + $0x8] sm:$0xff] %vm218, %v217
    // Predicated region
    $region22: #{tpu_custom_call.1} parent=1 // pred_check
      _
    $region23: #{tpu_custom_call.1} parent=1 // pred_check_branch
      %222 = sbr.rel (0) target = $region25
    $region24: #{tpu_custom_call.1} parent=1 // pred_region
      %s224 = ssub.s32 256, 256
      %225 = vsyncadd [#allocation4], %s224
      %s226 = sshll.u32 [#allocation7], 4
      %s227 = int_to_ptr.vmem [resolvable:$true] %s226
      %232 = dma.vmem_to_hbm [thread:$0]  %s227, 256, %s3, [#allocation4], 128, 128, 8
    $region25: #{tpu_custom_call.1} parent=1 // pred_fallthru
      _
    // Predicated region
    $region26: #{tpu_custom_call.1} parent=1 // pred_check
      _
    $region27: #{tpu_custom_call.1} parent=1 // pred_check_branch
      %234 = sbr.rel (0) target = $region29
    $region28: #{tpu_custom_call.1} parent=1 // pred_region
      %235 = dma.done [#allocation4], 256
    $region29: #{tpu_custom_call.1} parent=1 // pred_fallthru
      _
    %236 = vsyncpa [#allocation3], 1
    %237 = vsyncpa [#allocation6], 1
    %238 = vsyncpa [#allocation4], 1

</llo_original>
